<compile_context>
chip_gen: v7x
topology: tpu7x:2x2x1
jax: 0.10.0
libtpu: 0.0.40
codegen_flags: <defaults>
</compile_context>

<pallas_src>
import functools

import jax
import jax.numpy as jnp
from jax.experimental import pallas as pl
from jax.experimental.pallas import tpu as pltpu


def _round_up(x, m):
    return (x + m - 1) // m * m


def _rlbase_kernel(x_ref, p_ref, out_ref, *,
                   state_dim, hidden, n_actions,
                   off_w1, off_b1, off_w2, off_b2, off_wh, off_bh):
    x = x_ref[...]                                           # [TB, state_dim]

    # Static row-slices into the packed parameter buffer (all offsets 8-aligned).
    w1 = p_ref[off_w1:off_w1 + state_dim, :]                 # [state_dim, hidden]
    b1 = p_ref[off_b1:off_b1 + 1, :]                         # [1, hidden]
    w2 = p_ref[off_w2:off_w2 + hidden, :]                    # [hidden, hidden]
    b2 = p_ref[off_b2:off_b2 + 1, :]                         # [1, hidden]
    wh = p_ref[off_wh:off_wh + hidden, :]                    # [hidden, hidden] (cols > n_actions+1 are zero)
    bh = p_ref[off_bh:off_bh + 1, :]                         # [1, hidden]

    # --- common (base) network: Linear -> Tanh -> Linear -> Tanh ---
    h1 = jnp.tanh(jnp.dot(x, w1, preferred_element_type=jnp.float32) + b1)
    h2 = jnp.tanh(jnp.dot(h1, w2, preferred_element_type=jnp.float32) + b2)

    # --- fused actor+critic head: one matmul, columns [0:n_actions] = logits,
    #     column n_actions = critic value ---
    n_out = n_actions + 1
    heads_full = jnp.dot(h2, wh, preferred_element_type=jnp.float32) + bh
    heads = heads_full[:, :n_out]                            # [TB, n_actions+1]

    # Masked softmax over the actor columns only; critic column passes through.
    lane = jax.lax.broadcasted_iota(jnp.int32, heads.shape, 1)
    is_actor = lane < n_actions
    m = jnp.max(jnp.where(is_actor, heads, -jnp.inf), axis=-1, keepdims=True)
    e = jnp.exp(jnp.where(is_actor, heads - m, jnp.float32(-1e30)))
    denom = jnp.sum(e, axis=-1, keepdims=True)
    probs = e * pl.reciprocal(denom, approx=True)
    out_ref[...] = jnp.where(is_actor, probs, heads)


def pack_params(params, n_actions):
    """Fuse the two heads and pack everything into one 8-row-aligned f32 buffer."""
    w1, b1 = params["w1"], params["b1"]
    w2, b2 = params["w2"], params["b2"]
    wa, ba = params["wa"], params["ba"]
    wc, bc = params["wc"], params["bc"]
    state_dim, hidden = w1.shape
    assert hidden >= n_actions + 1, "packing assumes hidden >= n_actions + 1"

    # Fused head: [hidden, n_actions+1], zero-padded to `hidden` columns.
    wh = jnp.concatenate([wa, wc], axis=1)
    bh = jnp.concatenate([ba, bc], axis=1)
    pad_c = hidden - (n_actions + 1)
    wh = jnp.pad(wh, ((0, 0), (0, pad_c)))
    bh = jnp.pad(bh, ((0, 0), (0, pad_c)))

    sections = [w1, b1, w2, b2, wh, bh]
    offsets, padded, cur = [], [], 0
    for s in sections:
        offsets.append(cur)
        r = _round_up(s.shape[0], 8)
        padded.append(jnp.pad(s, ((0, r - s.shape[0]), (0, 0))))
        cur += r
    packed = jnp.concatenate(padded, axis=0).astype(jnp.float32)   # [cur, hidden]
    return packed, tuple(offsets)


def rlbase_forward(state, params, *, batch_block=512):
    """Fused actor-critic forward in one Pallas kernel.

    state:  [B, state_dim] float32
    params: dict of weights/biases (see init_params)
    returns (actor_probs [B, n_actions], critic_value [B, 1])
    """
    B, state_dim = state.shape
    hidden = params["w1"].shape[1]
    n_actions = params["wa"].shape[1]
    n_out = n_actions + 1

    packed, (o_w1, o_b1, o_w2, o_b2, o_wh, o_bh) = pack_params(params, n_actions)

    # Keep sublane tiles dense: pad batch to a multiple of 8.
    B_pad = _round_up(B, 8)
    if B_pad != B:
        state = jnp.pad(state, ((0, B_pad - B), (0, 0)))
    state = state.astype(jnp.float32)

    kernel = functools.partial(
        _rlbase_kernel,
        state_dim=state_dim, hidden=hidden, n_actions=n_actions,
        off_w1=o_w1, off_b1=o_b1, off_w2=o_w2, off_b2=o_b2,
        off_wh=o_wh, off_bh=o_bh)

    if B_pad <= batch_block:
        # Small batch: single full-extent block, no grid (avoid per-step overhead
        # on single-TC chips).
        out = pl.pallas_call(
            kernel,
            out_shape=jax.ShapeDtypeStruct((B_pad, n_out), jnp.float32),
            in_specs=[pl.BlockSpec(memory_space=pltpu.MemorySpace.VMEM),
                      pl.BlockSpec(memory_space=pltpu.MemorySpace.VMEM)],
            out_specs=pl.BlockSpec(memory_space=pltpu.MemorySpace.VMEM),
        )(state, packed)
    else:
        # Large batch: parallel grid over batch (shards across both TCs on v7x).
        tb = batch_block
        B_grid = _round_up(B_pad, tb)
        if B_grid != B_pad:
            state = jnp.pad(state, ((0, B_grid - B_pad), (0, 0)))
            B_pad = B_grid
        grid = (B_pad // tb,)
        out = pl.pallas_call(
            kernel,
            out_shape=jax.ShapeDtypeStruct((B_pad, n_out), jnp.float32),
            grid_spec=pltpu.PrefetchScalarGridSpec(
                num_scalar_prefetch=0,
                grid=grid,
                in_specs=[pl.BlockSpec((tb, state_dim), lambda i: (i, 0)),
                          pl.BlockSpec(packed.shape, lambda i: (0, 0))],
                out_specs=pl.BlockSpec((tb, n_out), lambda i: (i, 0)),
            ),
            compiler_params=pltpu.CompilerParams(
                dimension_semantics=("parallel",)),
        )(state, packed)

    probs = out[:B, :n_actions]
    value = out[:B, n_actions:]
    return probs, value


def init_params(key, state_dim, hidden, n_actions):
    """Deterministic synthetic parameter init (not a checkpoint load)."""
    ks = jax.random.split(key, 8)

    def lin(kw, kb, fan_in, fan_out):
        # PyTorch-style uniform(-1/sqrt(fan_in), 1/sqrt(fan_in))
        bound = 1.0 / jnp.sqrt(jnp.float32(fan_in))
        w = jax.random.uniform(kw, (fan_in, fan_out), jnp.float32, -bound, bound)
        b = jax.random.uniform(kb, (1, fan_out), jnp.float32, -bound, bound)
        return w, b

    w1, b1 = lin(ks[0], ks[1], state_dim, hidden)
    w2, b2 = lin(ks[2], ks[3], hidden, hidden)
    wa, ba = lin(ks[4], ks[5], hidden, n_actions)
    wc, bc = lin(ks[6], ks[7], hidden, 1)
    return {"w1": w1, "b1": b1, "w2": w2, "b2": b2,
            "wa": wa, "ba": ba, "wc": wc, "bc": bc}


def _reference_forward(state, p):
    h1 = jnp.tanh(state @ p["w1"] + p["b1"])
    h2 = jnp.tanh(h1 @ p["w2"] + p["b2"])
    logits = h2 @ p["wa"] + p["ba"]
    probs = jax.nn.softmax(logits, axis=-1)
    value = h2 @ p["wc"] + p["bc"]
    return probs, value


# TODO(synk): get_device/save/load/get_*_parameters are host-side torch utilities
# (checkpoint IO, optimizer param groups) with no kernel equivalent; only forward
# is implemented.

if __name__ == "__main__":
    STATE_DIM, HIDDEN, N_ACTIONS = 8, 32, 4

    key = jax.random.PRNGKey(0)
    k_params, k_state, k_big = jax.random.split(key, 3)
    params = init_params(k_params, STATE_DIM, HIDDEN, N_ACTIONS)

    # --- small batch (gridless single-block path) ---
    B = 8
    state = jax.random.normal(k_state, (B, STATE_DIM), jnp.float32)
    actor_probs, critic_value = rlbase_forward(state, params)
    jax.block_until_ready((actor_probs, critic_value))

    ref_probs, ref_value = _reference_forward(state, params)
    assert actor_probs.shape == (B, N_ACTIONS)
    assert critic_value.shape == (B, 1)
    # approx reciprocal in the softmax -> probs tolerance relaxed to 1e-3
    assert bool(jnp.allclose(actor_probs, ref_probs, atol=1e-3, rtol=1e-3))
    assert bool(jnp.allclose(critic_value, ref_value, atol=1e-5, rtol=1e-5))

    # --- large batch (parallel batch grid path, both TCs on v7x) ---
    BB = 1024
    big_state = jax.random.normal(k_big, (BB, STATE_DIM), jnp.float32)
    big_probs, big_value = rlbase_forward(big_state, params, batch_block=512)
    jax.block_until_ready((big_probs, big_value))

    ref_bp, ref_bv = _reference_forward(big_state, params)
    assert big_probs.shape == (BB, N_ACTIONS)
    assert big_value.shape == (BB, 1)
    assert bool(jnp.allclose(big_probs, ref_bp, atol=1e-3, rtol=1e-3))
    assert bool(jnp.allclose(big_value, ref_bv, atol=1e-5, rtol=1e-5))

    print("KERNEL_OK")
</pallas_src>

<mosaic_0001>
module attributes {stable_mosaic.version = 11 : i64} {
  func.func @_rlbase_kernel(%arg0: memref<8x8xf32, #tpu.memory_space<vmem>>, %arg1: memref<96x32xf32, #tpu.memory_space<vmem>>, %arg2: memref<8x5xf32, #tpu.memory_space<vmem>>) attributes {dimension_semantics = [], scalar_prefetch = 0 : i64, scratch_operands = 0 : i64, tpu.core_type = #tpu.core_type<tc>} {
    %c0 = arith.constant 0 : index
    %c0_0 = arith.constant 0 : index
    %0 = vector.load %arg0[%c0, %c0_0] : memref<8x8xf32, #tpu.memory_space<vmem>>, vector<8x8xf32>
    %c0_1 = arith.constant 0 : index
    %c0_2 = arith.constant 0 : index
    %1 = vector.load %arg1[%c0_1, %c0_2] : memref<96x32xf32, #tpu.memory_space<vmem>>, vector<8x32xf32>
    %c8 = arith.constant 8 : index
    %c0_3 = arith.constant 0 : index
    %2 = vector.load %arg1[%c8, %c0_3] : memref<96x32xf32, #tpu.memory_space<vmem>>, vector<1x32xf32>
    %c16 = arith.constant 16 : index
    %c0_4 = arith.constant 0 : index
    %3 = vector.load %arg1[%c16, %c0_4] : memref<96x32xf32, #tpu.memory_space<vmem>>, vector<32x32xf32>
    %c48 = arith.constant 48 : index
    %c0_5 = arith.constant 0 : index
    %4 = vector.load %arg1[%c48, %c0_5] : memref<96x32xf32, #tpu.memory_space<vmem>>, vector<1x32xf32>
    %c56 = arith.constant 56 : index
    %c0_6 = arith.constant 0 : index
    %5 = vector.load %arg1[%c56, %c0_6] : memref<96x32xf32, #tpu.memory_space<vmem>>, vector<32x32xf32>
    %c88 = arith.constant 88 : index
    %c0_7 = arith.constant 0 : index
    %6 = vector.load %arg1[%c88, %c0_7] : memref<96x32xf32, #tpu.memory_space<vmem>>, vector<1x32xf32>
    %cst = arith.constant dense<0.000000e+00> : vector<8x32xf32>
    %7 = tpu.matmul %0, %1, %cst {dimension_numbers = #tpu.dot_dimension_numbers<[1], [0], [0], [1], [0, 0, 1, 1], [], []>} : vector<8x8xf32>, vector<8x32xf32>, vector<8x32xf32> -> vector<8x32xf32>
    %8 = vector.broadcast %2 : vector<1x32xf32> to vector<8x32xf32>
    %9 = arith.addf %7, %8 : vector<8x32xf32>
    %10 = math.tanh %9 : vector<8x32xf32>
    %cst_8 = arith.constant dense<0.000000e+00> : vector<8x32xf32>
    %11 = tpu.matmul %10, %3, %cst_8 {dimension_numbers = #tpu.dot_dimension_numbers<[1], [0], [0], [1], [0, 0, 1, 1], [], []>} : vector<8x32xf32>, vector<32x32xf32>, vector<8x32xf32> -> vector<8x32xf32>
    %12 = vector.broadcast %4 : vector<1x32xf32> to vector<8x32xf32>
    %13 = arith.addf %11, %12 : vector<8x32xf32>
    %14 = math.tanh %13 : vector<8x32xf32>
    %cst_9 = arith.constant dense<0.000000e+00> : vector<8x32xf32>
    %15 = tpu.matmul %14, %5, %cst_9 {dimension_numbers = #tpu.dot_dimension_numbers<[1], [0], [0], [1], [0, 0, 1, 1], [], []>} : vector<8x32xf32>, vector<32x32xf32>, vector<8x32xf32> -> vector<8x32xf32>
    %16 = vector.broadcast %6 : vector<1x32xf32> to vector<8x32xf32>
    %17 = arith.addf %15, %16 : vector<8x32xf32>
    %18 = vector.extract_strided_slice %17 {offsets = [0, 0], sizes = [8, 5], strides = [1, 1]} : vector<8x32xf32> to vector<8x5xf32>
    %19 = tpu.iota {dimensions = array<i32: 1>} : vector<8x5xi32>
    %c4_i32 = arith.constant 4 : i32
    %20 = vector.broadcast %c4_i32 : i32 to vector<8x5xi32>
    %21 = arith.cmpi slt, %19, %20 : vector<8x5xi32>
    %cst_10 = arith.constant 0xFF800000 : f32
    %22 = vector.broadcast %cst_10 : f32 to vector<8x5xf32>
    %23 = arith.select %21, %18, %22 : vector<8x5xi1>, vector<8x5xf32>
    %cst_11 = arith.constant dense<0xFF800000> : vector<8xf32>
    %24 = vector.multi_reduction <maximumf>, %23, %cst_11 [1] : vector<8x5xf32> to vector<8xf32>
    %25 = vector.shape_cast %24 : vector<8xf32> to vector<8x1xf32>
    %26 = vector.broadcast %25 : vector<8x1xf32> to vector<8x5xf32>
    %27 = arith.subf %18, %26 : vector<8x5xf32>
    %cst_12 = arith.constant -1.000000e+30 : f32
    %28 = vector.broadcast %cst_12 : f32 to vector<8x5xf32>
    %29 = arith.select %21, %27, %28 : vector<8x5xi1>, vector<8x5xf32>
    %30 = math.exp %29 : vector<8x5xf32>
    %cst_13 = arith.constant dense<0.000000e+00> : vector<8xf32>
    %31 = vector.multi_reduction <add>, %30, %cst_13 [1] : vector<8x5xf32> to vector<8xf32>
    %32 = vector.shape_cast %31 : vector<8xf32> to vector<8x1xf32>
    %33 = tpu.reciprocal %32 {approx = true} : vector<8x1xf32> -> vector<8x1xf32>
    %34 = vector.broadcast %33 : vector<8x1xf32> to vector<8x5xf32>
    %35 = arith.mulf %30, %34 : vector<8x5xf32>
    %36 = arith.select %21, %35, %18 : vector<8x5xi1>, vector<8x5xf32>
    %c0_14 = arith.constant 0 : index
    %c0_15 = arith.constant 0 : index
    %37 = vector.load %arg2[%c0_14, %c0_15] : memref<8x5xf32, #tpu.memory_space<vmem>>, vector<8x5xf32>
    tpu.vector_store %arg2[%c0_14, %c0_15], %36 {strides = array<i32>} : memref<8x5xf32, #tpu.memory_space<vmem>>, vector<8x5xf32>,
    return
  }
}

</mosaic_0001>

<llo_original>
// kernel: tpu_custom_call.1
$region0: #{tpu_custom_call.1}
  #allocation0 [shape = 'u32[]', space=smem, size = 0x4, offset = 0x4, fixed_abs, tag = 'smem constant byte address 0x4 - core index']
  #allocation1 [shape = 'u32[144,128]{1,0:T(1,128)}', space=vmem, size = 0x12000, scoped, tag = 'internal scratch']
  %s0 = inlined_call_operand.vmem [shape: f32[8,8], index: 0, kind: input, shape index: {}]
  %s1 = inlined_call_operand.vmem [shape: f32[96,32], index: 1, kind: input, shape index: {}]
  %s2 = inlined_call_operand.hbm [shape: f32[8,5], index: 2, kind: output, shape index: {}]
  %s3 = sld [smem:[#allocation0]]
  $region18: #{tpu_custom_call.1} parent=0
    _
  %s5 = ssub.s32 1, %s3
  %s6 = scalar_select 0, %s5, %s3
  $region1: #{tpu_custom_call.1} parent=0
    #allocation2 [shape = 'u8[4096]{0}', space=vmem, size = 0x1000, scoped, tag = 'output window, operand 0, single buffered']
    #allocation3 [shape = 's32[1]{0}', space=sflag, size = 0x4, scoped, tag = 'scoped memory for tpu_custom_call.1']
    %7 = vsyncpa [#allocation3], 0
    // Predicated region
    $region2: #{tpu_custom_call.1} parent=1 // pred_check
      _
    $region3: #{tpu_custom_call.1} parent=1 // pred_check_branch
      %9 = sbr.rel (0) target = $region5
    $region4: #{tpu_custom_call.1} parent=1 // pred_region
      _
    $region5: #{tpu_custom_call.1} parent=1 // pred_fallthru
      _
    // Predicated region
    $region6: #{tpu_custom_call.1} parent=1 // pred_check
      _
    $region7: #{tpu_custom_call.1} parent=1 // pred_check_branch
      %11 = sbr.rel (0) target = $region9
    $region8: #{tpu_custom_call.1} parent=1 // pred_region
      _
    $region9: #{tpu_custom_call.1} parent=1 // pred_fallthru
      _
    %v12 = vld [vmem:[%s0] sm:$0xff]
    %v13 = vld [vmem:[%s1] sm:$0xff]
    %v14 = vld [vmem:[%s1 + $0x8] sm:$0x1]
    %v15 = vld [vmem:[%s1 + $0x10] sm:$0xff]
    %v16 = vld [vmem:[%s1 + $0x18] sm:$0xff]
    %v17 = vld [vmem:[%s1 + $0x20] sm:$0xff]
    %v18 = vld [vmem:[%s1 + $0x28] sm:$0xff]
    %v19 = vld [vmem:[%s1 + $0x30] sm:$0x1]
    %v20 = vld [vmem:[%s1 + $0x38] sm:$0xff]
    %v21 = vld [vmem:[%s1 + $0x40] sm:$0xff]
    %v22 = vld [vmem:[%s1 + $0x48] sm:$0xff]
    %v23 = vld [vmem:[%s1 + $0x50] sm:$0xff]
    %v24 = vld [vmem:[%s1 + $0x58] sm:$0x1]
    %v25 = vlaneseq
    %v26 = vshrl.u32 %v25, 7
    %v27 = vsub.s32 0, %v26
    %v28 = vrot.slane %v14, %v27
    %vm29 = vcmask 64512
    %v31 = vsel %vm29, %v12, 0
    %33 = vmatprep.subr.mxu0 0.0
    %34 = vmatpush1.msra.mxu0 %v13
    %35 = vmatprep.subr.mxu0 0.0
    %36 = vmatpush1.msra.mxu0 0.0
    %37 = vmatprep.subr.mxu0 0.0
    %38 = vmatpush1.msra.mxu0 0.0
    %39 = vmatprep.subr.mxu0 0.0
    %40 = vmatpush1.msra.mxu0 0.0
    %41 = vmatprep.subr.mxu0 0.0
    %42 = vmatpush1.msra.mxu0 0.0
    %43 = vmatprep.subr.mxu0 0.0
    %44 = vmatpush1.msra.mxu0 0.0
    %45 = vmatprep.subr.mxu0 0.0
    %46 = vmatpush1.msra.mxu0 0.0
    %47 = vmatprep.subr.mxu0 0.0
    %48 = vmatpush1.msra.mxu0 0.0
    %49 = vmatprep.subr.mxu0 0.0
    %50 = vmatpush1.msra.mxu0 0.0
    %51 = vmatprep.subr.mxu0 0.0
    %52 = vmatpush1.msra.mxu0 0.0
    %53 = vmatprep.subr.mxu0 0.0
    %54 = vmatpush1.msra.mxu0 0.0
    %55 = vmatprep.subr.mxu0 0.0
    %56 = vmatpush1.msra.mxu0 0.0
    %57 = vmatprep.subr.mxu0 0.0
    %58 = vmatpush1.msra.mxu0 0.0
    %59 = vmatprep.subr.mxu0 0.0
    %60 = vmatpush1.msra.mxu0 0.0
    %61 = vmatprep.subr.mxu0 0.0
    %62 = vmatpush1.msra.mxu0 0.0
    %63 = vmatprep.subr.mxu0 0.0
    %64 = vmatpush1.msra.mxu0 0.0
    %65 = vmatprep.subr.mxu0 0.0
    %66 = vmatpush1.msra.mxu0 0.0
    %67 = vmatprep.subr.mxu0 0.0
    %68 = vmatpush1.msra.mxu0 0.0
    %69 = vmatprep.subr.mxu0 0.0
    %70 = vmatpush1.msra.mxu0 0.0
    %71 = vmatprep.subr.mxu0 0.0
    %72 = vmatpush1.msra.mxu0 0.0
    %73 = vmatprep.subr.mxu0 0.0
    %74 = vmatpush1.msra.mxu0 0.0
    %75 = vmatprep.subr.mxu0 0.0
    %76 = vmatpush1.msra.mxu0 0.0
    %77 = vmatprep.subr.mxu0 0.0
    %78 = vmatpush1.msra.mxu0 0.0
    %79 = vmatprep.subr.mxu0 0.0
    %80 = vmatpush1.msra.mxu0 0.0
    %81 = vmatprep.subr.mxu0 0.0
    %82 = vmatpush1.msra.mxu0 0.0
    %83 = vmatprep.subr.mxu0 0.0
    %84 = vmatpush1.msra.mxu0 0.0
    %85 = vmatprep.subr.mxu0 0.0
    %86 = vmatpush1.msra.mxu0 0.0
    %87 = vmatprep.subr.mxu0 0.0
    %88 = vmatpush1.msra.mxu0 0.0
    %89 = vmatprep.subr.mxu0 0.0
    %90 = vmatpush1.msra.mxu0 0.0
    %91 = vmatprep.subr.mxu0 0.0
    %92 = vmatpush1.msra.mxu0 0.0
    %93 = vmatprep.subr.mxu0 0.0
    %94 = vmatpush1.msra.mxu0 0.0
    %95 = vmatprep.subr.mxu0 0.0
    %96 = vmatpush1.msra.mxu0 0.0
    %97 = vmatprep.mubr.f32.mxu0 0.0
    %98 = vmatmul.mubr.f32.gmra.mrb[0].mxu0 %v31
    %v99 = vpop.f32.mrb[0].mxu0
    %v100 = vadd.f32 %v28, %v99
    %v101 = vpop.f32.mrb[0].mxu0
    %102 = vdwg.mxu0
    %v103 = vtanh.pop %v100
    %v104 = vlaneseq
    %v105 = vshrl.u32 %v104, 7
    %v106 = vsub.s32 0, %v105
    %v107 = vrot.slane %v19, %v106
    %vm108 = vcmask 261120
    %v110 = vsel %vm108, %v103, 0
    %112 = vmatprep.subr.mxu0 0.0
    %113 = vmatpush1.msra.mxu0 %v15
    %114 = vmatprep.subr.mxu0 0.0
    %115 = vmatpush1.msra.mxu0 %v16
    %116 = vmatprep.subr.mxu0 0.0
    %117 = vmatpush1.msra.mxu0 %v17
    %118 = vmatprep.subr.mxu0 0.0
    %119 = vmatpush1.msra.mxu0 %v18
    %120 = vmatprep.subr.mxu0 0.0
    %121 = vmatpush1.msra.mxu0 0.0
    %122 = vmatprep.subr.mxu0 0.0
    %123 = vmatpush1.msra.mxu0 0.0
    %124 = vmatprep.subr.mxu0 0.0
    %125 = vmatpush1.msra.mxu0 0.0
    %126 = vmatprep.subr.mxu0 0.0
    %127 = vmatpush1.msra.mxu0 0.0
    %128 = vmatprep.subr.mxu0 0.0
    %129 = vmatpush1.msra.mxu0 0.0
    %130 = vmatprep.subr.mxu0 0.0
    %131 = vmatpush1.msra.mxu0 0.0
    %132 = vmatprep.subr.mxu0 0.0
    %133 = vmatpush1.msra.mxu0 0.0
    %134 = vmatprep.subr.mxu0 0.0
    %135 = vmatpush1.msra.mxu0 0.0
    %136 = vmatprep.subr.mxu0 0.0
    %137 = vmatpush1.msra.mxu0 0.0
    %138 = vmatprep.subr.mxu0 0.0
    %139 = vmatpush1.msra.mxu0 0.0
    %140 = vmatprep.subr.mxu0 0.0
    %141 = vmatpush1.msra.mxu0 0.0
    %142 = vmatprep.subr.mxu0 0.0
    %143 = vmatpush1.msra.mxu0 0.0
    %144 = vmatprep.subr.mxu0 0.0
    %145 = vmatpush1.msra.mxu0 0.0
    %146 = vmatprep.subr.mxu0 0.0
    %147 = vmatpush1.msra.mxu0 0.0
    %148 = vmatprep.subr.mxu0 0.0
    %149 = vmatpush1.msra.mxu0 0.0
    %150 = vmatprep.subr.mxu0 0.0
    %151 = vmatpush1.msra.mxu0 0.0
    %152 = vmatprep.subr.mxu0 0.0
    %153 = vmatpush1.msra.mxu0 0.0
    %154 = vmatprep.subr.mxu0 0.0
    %155 = vmatpush1.msra.mxu0 0.0
    %156 = vmatprep.subr.mxu0 0.0
    %157 = vmatpush1.msra.mxu0 0.0
    %158 = vmatprep.subr.mxu0 0.0
    %159 = vmatpush1.msra.mxu0 0.0
    %160 = vmatprep.subr.mxu0 0.0
    %161 = vmatpush1.msra.mxu0 0.0
    %162 = vmatprep.subr.mxu0 0.0
    %163 = vmatpush1.msra.mxu0 0.0
    %164 = vmatprep.subr.mxu0 0.0
    %165 = vmatpush1.msra.mxu0 0.0
    %166 = vmatprep.subr.mxu0 0.0
    %167 = vmatpush1.msra.mxu0 0.0
    %168 = vmatprep.subr.mxu0 0.0
    %169 = vmatpush1.msra.mxu0 0.0
    %170 = vmatprep.subr.mxu0 0.0
    %171 = vmatpush1.msra.mxu0 0.0
    %172 = vmatprep.subr.mxu0 0.0
    %173 = vmatpush1.msra.mxu0 0.0
    %174 = vmatprep.subr.mxu0 0.0
    %175 = vmatpush1.msra.mxu0 0.0
    %176 = vmatprep.mubr.f32.mxu0 0.0
    %177 = vmatmul.mubr.f32.gmra.mrb[0].mxu0 %v110
    %v178 = vpop.f32.mrb[0].mxu0
    %v179 = vadd.f32 %v107, %v178
    %v180 = vpop.f32.mrb[0].mxu0
    %181 = vdwg.mxu0
    %v182 = vtanh.pop %v179
    %v183 = vlaneseq
    %v184 = vshrl.u32 %v183, 7
    %v185 = vsub.s32 0, %v184
    %v186 = vrot.slane %v24, %v185
    %v188 = vsel %vm108, %v182, 0
    %190 = vmatprep.subr.mxu0 0.0
    %191 = vmatpush1.msra.mxu0 %v20
    %192 = vmatprep.subr.mxu0 0.0
    %193 = vmatpush1.msra.mxu0 %v21
    %194 = vmatprep.subr.mxu0 0.0
    %195 = vmatpush1.msra.mxu0 %v22
    %196 = vmatprep.subr.mxu0 0.0
    %197 = vmatpush1.msra.mxu0 %v23
    %198 = vmatprep.subr.mxu0 0.0
    %199 = vmatpush1.msra.mxu0 0.0
    %200 = vmatprep.subr.mxu0 0.0
    %201 = vmatpush1.msra.mxu0 0.0
    %202 = vmatprep.subr.mxu0 0.0
    %203 = vmatpush1.msra.mxu0 0.0
    %204 = vmatprep.subr.mxu0 0.0
    %205 = vmatpush1.msra.mxu0 0.0
    %206 = vmatprep.subr.mxu0 0.0
    %207 = vmatpush1.msra.mxu0 0.0
    %208 = vmatprep.subr.mxu0 0.0
    %209 = vmatpush1.msra.mxu0 0.0
    %210 = vmatprep.subr.mxu0 0.0
    %211 = vmatpush1.msra.mxu0 0.0
    %212 = vmatprep.subr.mxu0 0.0
    %213 = vmatpush1.msra.mxu0 0.0
    %214 = vmatprep.subr.mxu0 0.0
    %215 = vmatpush1.msra.mxu0 0.0
    %216 = vmatprep.subr.mxu0 0.0
    %217 = vmatpush1.msra.mxu0 0.0
    %218 = vmatprep.subr.mxu0 0.0
    %219 = vmatpush1.msra.mxu0 0.0
    %220 = vmatprep.subr.mxu0 0.0
    %221 = vmatpush1.msra.mxu0 0.0
    %222 = vmatprep.subr.mxu0 0.0
    %223 = vmatpush1.msra.mxu0 0.0
    %224 = vmatprep.subr.mxu0 0.0
    %225 = vmatpush1.msra.mxu0 0.0
    %226 = vmatprep.subr.mxu0 0.0
    %227 = vmatpush1.msra.mxu0 0.0
    %228 = vmatprep.subr.mxu0 0.0
    %229 = vmatpush1.msra.mxu0 0.0
    %230 = vmatprep.subr.mxu0 0.0
    %231 = vmatpush1.msra.mxu0 0.0
    %232 = vmatprep.subr.mxu0 0.0
    %233 = vmatpush1.msra.mxu0 0.0
    %234 = vmatprep.subr.mxu0 0.0
    %235 = vmatpush1.msra.mxu0 0.0
    %236 = vmatprep.subr.mxu0 0.0
    %237 = vmatpush1.msra.mxu0 0.0
    %238 = vmatprep.subr.mxu0 0.0
    %239 = vmatpush1.msra.mxu0 0.0
    %240 = vmatprep.subr.mxu0 0.0
    %241 = vmatpush1.msra.mxu0 0.0
    %242 = vmatprep.subr.mxu0 0.0
    %243 = vmatpush1.msra.mxu0 0.0
    %244 = vmatprep.subr.mxu0 0.0
    %245 = vmatpush1.msra.mxu0 0.0
    %246 = vmatprep.subr.mxu0 0.0
    %247 = vmatpush1.msra.mxu0 0.0
    %248 = vmatprep.subr.mxu0 0.0
    %249 = vmatpush1.msra.mxu0 0.0
    %250 = vmatprep.subr.mxu0 0.0
    %251 = vmatpush1.msra.mxu0 0.0
    %252 = vmatprep.subr.mxu0 0.0
    %253 = vmatpush1.msra.mxu0 0.0
    %254 = vmatprep.mubr.f32.mxu0 0.0
    %255 = vmatmul.mubr.f32.gmra.mrb[0].mxu0 %v188
    %v256 = vpop.f32.mrb[0].mxu0
    %v257 = vadd.f32 %v186, %v256
    %v258 = vpop.f32.mrb[0].mxu0
    %259 = vdwg.mxu0
    %v260 = vlaneseq
    %v261 = vand.u32 %v260, 127
    %vm262 = vcmp.lt.s32.totalorder %v261, 4
    %v263 = vsel %vm262, %v257, -inf
    %vm264 = vcmask 39936
    %v265 = vsel %vm264, %v263, -inf
    %266 = vmax.xlane.f32.xlu0 %v265
    %v267 = vpop.xlane.xlu0 %266
    %v268 = vsub.f32 %v257, %v267
    %v269 = vsel %vm262, %v268, -1e+30
    %v270 = vmul.f32 %v269, 1.442695
    %v271 = vpow.pop %v270
    %v272 = vsel %vm264, %v271, 0.0
    %273 = vadd.xlane.f32.xlu0 %v272
    %v274 = vpop.xlane.xlu0 %273
    %v275 = vrcp.pop %v274
    %v276 = vmul.f32 %v271, %v275
    %v277 = vsel %vm262, %v276, %v257
    %278 = vst.msk [vmem:[#allocation2] sm:$0xff] %vm264, %v277
    // Predicated region
    $region10: #{tpu_custom_call.1} parent=1 // pred_check
      _
    $region11: #{tpu_custom_call.1} parent=1 // pred_check_branch
      %280 = sbr.rel (0) target = $region13
    $region12: #{tpu_custom_call.1} parent=1 // pred_region
      %s282 = ssub.s32 128, 128
      %283 = vsyncadd [#allocation3], %s282
      %s285 = sshll.u32 [#allocation2], 4
      %s286 = int_to_ptr.vmem [resolvable:$true] %s285
      %288 = dma.vmem_to_hbm [thread:$0]  %s286, 128, %s2, [#allocation3]
    $region13: #{tpu_custom_call.1} parent=1 // pred_fallthru
      _
    // Predicated region
    $region14: #{tpu_custom_call.1} parent=1 // pred_check
      _
    $region15: #{tpu_custom_call.1} parent=1 // pred_check_branch
      %290 = sbr.rel (0) target = $region17
    $region16: #{tpu_custom_call.1} parent=1 // pred_region
      %291 = dma.done [#allocation3], 128
    $region17: #{tpu_custom_call.1} parent=1 // pred_fallthru
      _
    %292 = vsyncpa [#allocation3], 1

</llo_original>
